<compile_context>
chip_gen: v7x
topology: tpu7x:2x2x1
jax: 0.10.0
libtpu: 0.0.40
codegen_flags: <defaults>
</compile_context>

<pallas_src>
import functools

import jax
import jax.numpy as jnp
from jax.experimental import pallas as pl
from jax.experimental.pallas import tpu as pltpu


# ----------------------------------------------------------------------------
# Kernel: one batch block of `nb` elements, fully resident in VMEM.
# ----------------------------------------------------------------------------
def _laplace_attention_kernel(nb, inv_scale, use_softmax,
                              q_ref, k_ref, v_ref, o_ref):
    # Static (small) loop over the batch elements of this block; each iteration
    # is pure 2-D/3-D math, no cross-iteration dependence.
    for i in range(nb):
        qn = q_ref[i].astype(jnp.float32)          # (C, S)
        kn = k_ref[i].astype(jnp.float32)          # (C, S)
        vn = v_ref[i].astype(jnp.float32)          # (C, S)

        # Pairwise negative L1 distance over the sequence axis:
        #   w[cq, ck] = -(1/scale) * sum_s |k[ck, s] - q[cq, s]|
        diff = jnp.abs(kn[None, :, :] - qn[:, None, :])       # (C, C, S)
        w = jnp.sum(diff, axis=-1) * (-inv_scale)              # (C, C)

        if use_softmax:  # act == 'smax'
            w = w - jnp.max(w, axis=-1, keepdims=True)
            p = jnp.exp(w)
            denom = jnp.sum(p, axis=-1, keepdims=True)
            w = p * pl.reciprocal(denom, approx=True)           # EUP, ~free

        # rep[c, s] = sum_d w[c, d] * v[d, s]   (single MXU matmul)
        rep = jnp.dot(w, vn, preferred_element_type=jnp.float32)  # (C, S)
        o_ref[i] = rep.astype(o_ref.dtype)


# ----------------------------------------------------------------------------
# Wrapper mirroring LaplaceAttention.forward
# ----------------------------------------------------------------------------
def laplace_attention(q, k=None, v=None, *, scale=2.0, act="smax",
                      batch_blocks=2):
    """q, k, v: (N, C, S). Returns (N, C, S)."""
    if k is None:
        # torch.flip(q, (-1, -2)) equivalent; plain-JAX glue outside the kernel.
        k = jnp.flip(q, axis=(-1, -2))
    if v is None:
        v = q

    N, C, S = q.shape
    use_softmax = (act == "smax")

    # Split the batch into `batch_blocks` parallel chunks (v7x: one per TC);
    # fall back to a single fully-folded block if it does not divide evenly.
    nblk = batch_blocks if (batch_blocks >= 1 and N % batch_blocks == 0) else 1
    nb = N // nblk

    kernel = functools.partial(_laplace_attention_kernel, nb,
                               1.0 / float(scale), use_softmax)

    grid_spec = pltpu.PrefetchScalarGridSpec(
        num_scalar_prefetch=0,
        grid=(nblk,),
        in_specs=[
            pl.BlockSpec((nb, C, S), lambda b: (b, 0, 0)),   # q
            pl.BlockSpec((nb, C, S), lambda b: (b, 0, 0)),   # k
            pl.BlockSpec((nb, C, S), lambda b: (b, 0, 0)),   # v
        ],
        out_specs=pl.BlockSpec((nb, C, S), lambda b: (b, 0, 0)),
    )
    return pl.pallas_call(
        kernel,
        out_shape=jax.ShapeDtypeStruct((N, C, S), q.dtype),
        grid_spec=grid_spec,
        compiler_params=pltpu.CompilerParams(
            dimension_semantics=("parallel",)),
    )(q, k, v)


# ----------------------------------------------------------------------------
# Pure-JAX reference (mirrors the PyTorch forward exactly)
# ----------------------------------------------------------------------------
def laplace_attention_ref(q, k=None, v=None, *, scale=2.0, act="smax"):
    if k is None:
        k = jnp.flip(q, axis=(-1, -2))
    if v is None:
        v = q
    kx = k[:, None, :, :]                         # (N, 1, C, S)
    qx = q[:, :, None, :]                         # (N, C, 1, S)
    w = -(jnp.abs(kx - qx) / scale).sum(axis=-1)  # (N, C, C)
    if act == "smax":
        w = jax.nn.softmax(w, axis=-1)
    return jnp.einsum("ncd,nds->ncs", w, v)       # (N, C, S)


if __name__ == "__main__":
    # in_shape = (C, S) = (8, 32); batch N = 2; scale = 2; act = 'smax'.
    N, C, S = 2, 8, 32
    scale = 2.0

    key = jax.random.PRNGKey(0)
    kq, kk, kv = jax.random.split(key, 3)
    q = jax.random.normal(kq, (N, C, S), jnp.float32)

    # Case 1: k = v = None (default path with the flipped-q key).
    out = jax.block_until_ready(laplace_attention(q, scale=scale, act="smax"))
    ref = laplace_attention_ref(q, scale=scale, act="smax")
    assert out.shape == (N, C, S)
    # Tolerance 2e-3: the kernel uses the approximate EUP reciprocal in the
    # softmax normalization (pl.reciprocal(approx=True)).
    assert jnp.allclose(out, ref, atol=2e-3, rtol=2e-3), \
        f"max abs err {jnp.max(jnp.abs(out - ref))}"

    # Case 2: explicit k and v.
    k_in = jax.random.normal(kk, (N, C, S), jnp.float32)
    v_in = jax.random.normal(kv, (N, C, S), jnp.float32)
    out2 = jax.block_until_ready(
        laplace_attention(q, k_in, v_in, scale=scale, act="smax"))
    ref2 = laplace_attention_ref(q, k_in, v_in, scale=scale, act="smax")
    assert jnp.allclose(out2, ref2, atol=2e-3, rtol=2e-3), \
        f"max abs err {jnp.max(jnp.abs(out2 - ref2))}"

    print("KERNEL_OK")
</pallas_src>

<mosaic_0001>
module attributes {stable_mosaic.version = 11 : i64} {
  func.func @_laplace_attention_kernel(%arg0: i32, %arg1: memref<1x8x32xf32, #tpu.memory_space<vmem>>, %arg2: memref<1x8x32xf32, #tpu.memory_space<vmem>>, %arg3: memref<1x8x32xf32, #tpu.memory_space<vmem>>, %arg4: memref<1x8x32xf32, #tpu.memory_space<vmem>>) attributes {dimension_semantics = [#tpu.dimension_semantics<parallel>], iteration_bounds = array<i64: 2>, scalar_prefetch = 0 : i64, scratch_operands = 0 : i64, tpu.core_type = #tpu.core_type<tc>, window_params = [{transform_indices = @transform_0, window_bounds = array<i64: 1, 8, 32>}, {transform_indices = @transform_1, window_bounds = array<i64: 1, 8, 32>}, {transform_indices = @transform_2, window_bounds = array<i64: 1, 8, 32>}, {transform_indices = @transform_3, window_bounds = array<i64: 1, 8, 32>}]} {
    %c0 = arith.constant 0 : index
    %c0_0 = arith.constant 0 : index
    %c0_1 = arith.constant 0 : index
    %0 = vector.load %arg1[%c0, %c0_0, %c0_1] : memref<1x8x32xf32, #tpu.memory_space<vmem>>, vector<1x8x32xf32>
    %1 = vector.shape_cast %0 : vector<1x8x32xf32> to vector<8x32xf32>
    %c0_2 = arith.constant 0 : index
    %c0_3 = arith.constant 0 : index
    %c0_4 = arith.constant 0 : index
    %2 = vector.load %arg2[%c0_2, %c0_3, %c0_4] : memref<1x8x32xf32, #tpu.memory_space<vmem>>, vector<1x8x32xf32>
    %3 = vector.shape_cast %2 : vector<1x8x32xf32> to vector<8x32xf32>
    %c0_5 = arith.constant 0 : index
    %c0_6 = arith.constant 0 : index
    %c0_7 = arith.constant 0 : index
    %4 = vector.load %arg3[%c0_5, %c0_6, %c0_7] : memref<1x8x32xf32, #tpu.memory_space<vmem>>, vector<1x8x32xf32>
    %5 = vector.shape_cast %4 : vector<1x8x32xf32> to vector<8x32xf32>
    %6 = vector.shape_cast %3 : vector<8x32xf32> to vector<1x8x32xf32>
    %7 = vector.shape_cast %1 : vector<8x32xf32> to vector<8x1x32xf32>
    %8 = vector.broadcast %6 : vector<1x8x32xf32> to vector<8x8x32xf32>
    %9 = vector.broadcast %7 : vector<8x1x32xf32> to vector<8x8x32xf32>
    %10 = arith.subf %8, %9 : vector<8x8x32xf32>
    %11 = math.absf %10 : vector<8x8x32xf32>
    %cst = arith.constant dense<0.000000e+00> : vector<8x8xf32>
    %12 = vector.multi_reduction <add>, %11, %cst [2] : vector<8x8x32xf32> to vector<8x8xf32>
    %cst_8 = arith.constant -5.000000e-01 : f32
    %13 = vector.broadcast %cst_8 : f32 to vector<8x8xf32>
    %14 = arith.mulf %12, %13 : vector<8x8xf32>
    %cst_9 = arith.constant dense<0xFF800000> : vector<8xf32>
    %15 = vector.multi_reduction <maximumf>, %14, %cst_9 [1] : vector<8x8xf32> to vector<8xf32>
    %16 = vector.shape_cast %15 : vector<8xf32> to vector<8x1xf32>
    %17 = vector.broadcast %16 : vector<8x1xf32> to vector<8x8xf32>
    %18 = arith.subf %14, %17 : vector<8x8xf32>
    %19 = math.exp %18 : vector<8x8xf32>
    %cst_10 = arith.constant dense<0.000000e+00> : vector<8xf32>
    %20 = vector.multi_reduction <add>, %19, %cst_10 [1] : vector<8x8xf32> to vector<8xf32>
    %21 = vector.shape_cast %20 : vector<8xf32> to vector<8x1xf32>
    %22 = tpu.reciprocal %21 {approx = true} : vector<8x1xf32> -> vector<8x1xf32>
    %23 = vector.broadcast %22 : vector<8x1xf32> to vector<8x8xf32>
    %24 = arith.mulf %19, %23 : vector<8x8xf32>
    %cst_11 = arith.constant dense<0.000000e+00> : vector<8x32xf32>
    %25 = tpu.matmul %24, %5, %cst_11 {dimension_numbers = #tpu.dot_dimension_numbers<[1], [0], [0], [1], [0, 0, 1, 1], [], []>} : vector<8x8xf32>, vector<8x32xf32>, vector<8x32xf32> -> vector<8x32xf32>
    %c0_12 = arith.constant 0 : index
    %c0_13 = arith.constant 0 : index
    %c0_14 = arith.constant 0 : index
    %26 = vector.load %arg4[%c0_12, %c0_13, %c0_14] : memref<1x8x32xf32, #tpu.memory_space<vmem>>, vector<1x8x32xf32>
    %27 = vector.shape_cast %26 : vector<1x8x32xf32> to vector<8x32xf32>
    %28 = vector.shape_cast %25 : vector<8x32xf32> to vector<1x8x32xf32>
    tpu.vector_store %arg4[%c0_12, %c0_13, %c0_14], %28 {strides = array<i32>} : memref<1x8x32xf32, #tpu.memory_space<vmem>>, vector<1x8x32xf32>,
    return
  }
  func.func @transform_0(%arg0: i32) -> (i32, i32, i32) {
    %c0_i32 = arith.constant 0 : i32
    %c0_i32_0 = arith.constant 0 : i32
    %c0_i32_1 = arith.constant 0 : i32
    return %arg0, %c0_i32, %c0_i32_0 : i32, i32, i32
  }
  func.func @transform_1(%arg0: i32) -> (i32, i32, i32) {
    %c0_i32 = arith.constant 0 : i32
    %c0_i32_0 = arith.constant 0 : i32
    %c0_i32_1 = arith.constant 0 : i32
    return %arg0, %c0_i32, %c0_i32_0 : i32, i32, i32
  }
  func.func @transform_2(%arg0: i32) -> (i32, i32, i32) {
    %c0_i32 = arith.constant 0 : i32
    %c0_i32_0 = arith.constant 0 : i32
    %c0_i32_1 = arith.constant 0 : i32
    return %arg0, %c0_i32, %c0_i32_0 : i32, i32, i32
  }
  func.func @transform_3(%arg0: i32) -> (i32, i32, i32) {
    %c0_i32 = arith.constant 0 : i32
    %c0_i32_0 = arith.constant 0 : i32
    %c0_i32_1 = arith.constant 0 : i32
    return %arg0, %c0_i32, %c0_i32_0 : i32, i32, i32
  }
}

</mosaic_0001>

<llo_original>
// kernel: tpu_custom_call.1
$region0: #{tpu_custom_call.1}
  #allocation0 [shape = 'u32[]', space=smem, size = 0x4, offset = 0x4, fixed_abs, tag = 'smem constant byte address 0x4 - core index']
  #allocation1 [shape = 'u32[144,128]{1,0:T(1,128)}', space=vmem, size = 0x12000, scoped, tag = 'internal scratch']
  %s0 = inlined_call_operand.hbm [shape: f32[2,8,32], index: 0, kind: input, shape index: {}]
  %s1 = inlined_call_operand.hbm [shape: f32[2,8,32], index: 1, kind: input, shape index: {}]
  %s2 = inlined_call_operand.hbm [shape: f32[2,8,32], index: 2, kind: input, shape index: {}]
  %s3 = inlined_call_operand.hbm [shape: f32[2,8,32], index: 3, kind: output, shape index: {}]
  %s4 = sld [smem:[#allocation0]]
  $region57: #{tpu_custom_call.1} parent=0
    _
  %s6 = ssub.s32 1, %s4
  %s7 = scalar_select 0, %s6, %s4
  $region1: #{tpu_custom_call.1} parent=0
    #allocation2 [shape = 'u8[8192]{0}', space=vmem, size = 0x2000, scoped, tag = 'input window, operand 0']
    #allocation3 [shape = 's32[2]{0}', space=sflag, size = 0x8, scoped, tag = 'scoped memory for tpu_custom_call.1']
    #allocation4 [shape = 's32[2]{0}', space=sflag, size = 0x8, scoped, tag = 'scoped memory for tpu_custom_call.1']
    #allocation5 [shape = 'u8[8192]{0}', space=vmem, size = 0x2000, scoped, tag = 'input window, operand 1']
    #allocation6 [shape = 's32[2]{0}', space=sflag, size = 0x8, scoped, tag = 'scoped memory for tpu_custom_call.1']
    #allocation7 [shape = 'u8[8192]{0}', space=vmem, size = 0x2000, scoped, tag = 'input window, operand 2']
    #allocation8 [shape = 'u8[8192]{0}', space=vmem, size = 0x2000, scoped, tag = 'output window, operand 0']
    %8 = vsyncpa [#allocation3], 0
    %s9 = scalar_lea.sflag [#allocation3], 1
    %10 = vsyncpa %s9, 0
    %11 = vsyncpa [#allocation6], 0
    %s12 = scalar_lea.sflag [#allocation6], 1
    %13 = vsyncpa %s12, 0
    %14 = vsyncpa [#allocation4], 0
    %s15 = scalar_lea.sflag [#allocation4], 1
    %16 = vsyncpa %s15, 0
    loop: start=0, step=1, limit=4
    $region2: #{tpu_custom_call.1} parent=1 // loop_pre_header
      _
    $region3: #{tpu_custom_call.1} parent=1 // loop_header
      %s18 = sphi 0, %s22
      %p19 = scmp.ge.s32.totalorder %s18, 4
      %s28 = sphi 0, %s30
      %s31 = sphi 0, %s28
      %s32 = sphi 0, %s31
      %s48 = sphi 0, %s32
      %s54 = sphi 0, %s56
      %s57 = sphi 0, %s54
      %s58 = sphi 0, %s57
      %s74 = sphi 0, %s58
      %s80 = sphi 0, %s82
      %s83 = sphi 0, %s80
      %s84 = sphi 0, %s83
      %s100 = sphi 0, %s84
      %s106 = sphi 0, %s108
      %s109 = sphi 0, %s106
      %s110 = sphi 0, %s109
      %s126 = sphi 0, %s110
    $region4: #{tpu_custom_call.1} parent=1 // loop_header_branch
      %21 = sbr.rel (%p19) target = $region8
    $region5: #{tpu_custom_call.1} parent=1 // loop_body
      %s23 = ssub.s32 %s18, 1
      %s24 = ssub.s32 %s18, 2
      %s25 = sadd.s32 %s18, 1
      %s26 = ssub.s32 %s18, %s25
      %p27 = scmp.eq.s32.totalorder %s26, 0
      %s29 = sadd.s32 %s28, 1
      %s30 = scalar_select %p27, %s28, %s29
      %p33 = pneg %p27
      %p34 = scmp.eq.s32.totalorder %s18, 1
      %p35 = por %p33, %p34
      %p36 = scmp.ne.s32.totalorder %s28, %s31
      %p37 = scmp.eq.s32.totalorder %s18, 0
      %p38 = por %p36, %p37
      %p39 = scmp.ne.s32.totalorder %s28, %s31
      %p40 = scmp.eq.s32.totalorder %s23, 1
      %p41 = por %p39, %p40
      %p42 = scmp.ne.s32.totalorder %s31, %s32
      %p43 = scmp.eq.s32.totalorder %s23, 0
      %p44 = por %p42, %p43
      %p45 = scmp.ne.s32.totalorder %s31, %s32
      %p46 = scmp.eq.s32.totalorder %s24, 1
      %p47 = por %p45, %p46
      %p49 = scmp.ne.s32.totalorder %s32, %s48
      %p50 = scmp.eq.s32.totalorder %s24, 0
      %p51 = por %p49, %p50
      %s52 = ssub.s32 %s18, %s25
      %p53 = scmp.eq.s32.totalorder %s52, 0
      %s55 = sadd.s32 %s54, 1
      %s56 = scalar_select %p53, %s54, %s55
      %p59 = pneg %p53
      %p60 = scmp.eq.s32.totalorder %s18, 1
      %p61 = por %p59, %p60
      %p62 = scmp.ne.s32.totalorder %s54, %s57
      %p63 = scmp.eq.s32.totalorder %s18, 0
      %p64 = por %p62, %p63
      %p65 = scmp.ne.s32.totalorder %s54, %s57
      %p66 = scmp.eq.s32.totalorder %s23, 1
      %p67 = por %p65, %p66
      %p68 = scmp.ne.s32.totalorder %s57, %s58
      %p69 = scmp.eq.s32.totalorder %s23, 0
      %p70 = por %p68, %p69
      %p71 = scmp.ne.s32.totalorder %s57, %s58
      %p72 = scmp.eq.s32.totalorder %s24, 1
      %p73 = por %p71, %p72
      %p75 = scmp.ne.s32.totalorder %s58, %s74
      %p76 = scmp.eq.s32.totalorder %s24, 0
      %p77 = por %p75, %p76
      %s78 = ssub.s32 %s18, %s25
      %p79 = scmp.eq.s32.totalorder %s78, 0
      %s81 = sadd.s32 %s80, 1
      %s82 = scalar_select %p79, %s80, %s81
      %p85 = pneg %p79
      %p86 = scmp.eq.s32.totalorder %s18, 1
      %p87 = por %p85, %p86
      %p88 = scmp.ne.s32.totalorder %s80, %s83
      %p89 = scmp.eq.s32.totalorder %s18, 0
      %p90 = por %p88, %p89
      %p91 = scmp.ne.s32.totalorder %s80, %s83
      %p92 = scmp.eq.s32.totalorder %s23, 1
      %p93 = por %p91, %p92
      %p94 = scmp.ne.s32.totalorder %s83, %s84
      %p95 = scmp.eq.s32.totalorder %s23, 0
      %p96 = por %p94, %p95
      %p97 = scmp.ne.s32.totalorder %s83, %s84
      %p98 = scmp.eq.s32.totalorder %s24, 1
      %p99 = por %p97, %p98
      %p101 = scmp.ne.s32.totalorder %s84, %s100
      %p102 = scmp.eq.s32.totalorder %s24, 0
      %p103 = por %p101, %p102
      %s104 = ssub.s32 %s18, %s25
      %p105 = scmp.eq.s32.totalorder %s104, 0
      %s107 = sadd.s32 %s106, 1
      %s108 = scalar_select %p105, %s106, %s107
      %p111 = pneg %p105
      %p112 = scmp.eq.s32.totalorder %s18, 1
      %p113 = por %p111, %p112
      %p114 = scmp.ne.s32.totalorder %s106, %s109
      %p115 = scmp.eq.s32.totalorder %s18, 0
      %p116 = por %p114, %p115
      %p117 = scmp.ne.s32.totalorder %s106, %s109
      %p118 = scmp.eq.s32.totalorder %s23, 1
      %p119 = por %p117, %p118
      %p120 = scmp.ne.s32.totalorder %s109, %s110
      %p121 = scmp.eq.s32.totalorder %s23, 0
      %p122 = por %p120, %p121
      %p123 = scmp.ne.s32.totalorder %s109, %s110
      %p124 = scmp.eq.s32.totalorder %s24, 1
      %p125 = por %p123, %p124
      %p127 = scmp.ne.s32.totalorder %s110, %s126
      %p128 = scmp.eq.s32.totalorder %s24, 0
      %p129 = por %p127, %p128
      %p130 = scmp.le.s32.totalorder 1, %s18
      %p131 = scmp.lt.s32.totalorder %s18, 3
      %p132 = pnand %p130, %p131
      %p133 = pneg %p132
      // Predicated region
      $region9: #{tpu_custom_call.1} parent=5 // pred_check
        _
      $region10: #{tpu_custom_call.1} parent=5 // pred_check_branch
        %135 = sbr.rel (%p132) target = $region12
      $region11: #{tpu_custom_call.1} parent=5 // pred_region
        %s136 = ssub.s32 %s18, 1
      $region12: #{tpu_custom_call.1} parent=5 // pred_fallthru
        _
      %p137 = scmp.lt.s32.totalorder %s18, 2
      // Predicated region
      $region13: #{tpu_custom_call.1} parent=5 // pred_check
        %p138 = pneg %p137
      $region14: #{tpu_custom_call.1} parent=5 // pred_check_branch
        %140 = sbr.rel (%p138) target = $region16
      $region15: #{tpu_custom_call.1} parent=5 // pred_region
        // Predicated region
        $region17: #{tpu_custom_call.1} parent=15 // pred_check
          %p141 = pneg %p38
        $region18: #{tpu_custom_call.1} parent=15 // pred_check_branch
          %143 = sbr.rel (%p141) target = $region20
        $region19: #{tpu_custom_call.1} parent=15 // pred_region
          %s144 = sand.u32 %s28, 1
          %s145 = scalar_lea.sflag [#allocation3], %s144
          %s146 = sand.u32 %s28, 1
          %s147 = smul.addr %s146, 8
          %s148 = scalar_lea.vmem [#allocation2], %s147
          %s150 = ssub.s32 128, 128
          %151 = vsyncadd %s145, %s150
          %s152 = smul.addr %s18, 128
          %s153 = scalar_lea.hbm %s0, %s152
          %s155 = sshll.u32 %s148, 4
          %s156 = int_to_ptr.vmem [resolvable:$true] %s155
          %158 = dma.hbm_to_vmem [thread:$0]  %s153, 128, %s156, %s145
        $region20: #{tpu_custom_call.1} parent=15 // pred_fallthru
          _
        // Predicated region
        $region21: #{tpu_custom_call.1} parent=15 // pred_check
          %p159 = pneg %p64
        $region22: #{tpu_custom_call.1} parent=15 // pred_check_branch
          %161 = sbr.rel (%p159) target = $region24
        $region23: #{tpu_custom_call.1} parent=15 // pred_region
          %s162 = sand.u32 %s18, 1
          %s163 = scalar_lea.sflag [#allocation6], %s162
          %s164 = sand.u32 %s54, 1
          %s165 = smul.addr %s164, 8
          %s166 = scalar_lea.vmem [#allocation5], %s165
          %s168 = ssub.s32 128, 128
          %169 = vsyncadd %s163, %s168
          %s170 = smul.addr %s18, 128
          %s171 = scalar_lea.hbm %s1, %s170
          %s173 = sshll.u32 %s166, 4
          %s174 = int_to_ptr.vmem [resolvable:$true] %s173
          %176 = dma.hbm_to_vmem [thread:$0]  %s171, 128, %s174, %s163
        $region24: #{tpu_custom_call.1} parent=15 // pred_fallthru
          _
        // Predicated region
        $region25: #{tpu_custom_call.1} parent=15 // pred_check
          %p177 = pneg %p90
        $region26: #{tpu_custom_call.1} parent=15 // pred_check_branch
          %179 = sbr.rel (%p177) target = $region28
        $region27: #{tpu_custom_call.1} parent=15 // pred_region
          %s180 = sand.u32 %s18, 1
          %s181 = scalar_lea.sflag [#allocation6], %s180
          %s182 = sand.u32 %s80, 1
          %s183 = smul.addr %s182, 8
          %s184 = scalar_lea.vmem [#allocation7], %s183
          %s186 = ssub.s32 128, 128
          %187 = vsyncadd %s181, %s186
          %s188 = smul.addr %s18, 128
          %s189 = scalar_lea.hbm %s2, %s188
          %s191 = sshll.u32 %s184, 4
          %s192 = int_to_ptr.vmem [resolvable:$true] %s191
          %194 = dma.hbm_to_vmem [thread:$0]  %s189, 128, %s192, %s181
        $region28: #{tpu_custom_call.1} parent=15 // pred_fallthru
          _
      $region16: #{tpu_custom_call.1} parent=5 // pred_fallthru
        _
      %p195 = scmp.le.s32.totalorder 1, %s18
      %p196 = scmp.lt.s32.totalorder %s18, 3
      %p197 = pnand %p195, %p196
      %p198 = pneg %p197
      // Predicated region
      $region29: #{tpu_custom_call.1} parent=5 // pred_check
        _
      $region30: #{tpu_custom_call.1} parent=5 // pred_check_branch
        %200 = sbr.rel (%p197) target = $region32
      $region31: #{tpu_custom_call.1} parent=5 // pred_region
        %s201 = ssub.s32 %s18, 1
        %s202 = sand.u32 %s31, 1
        %s203 = scalar_lea.sflag [#allocation3], %s202
        %s204 = sand.u32 %s31, 1
        %s205 = smul.addr %s204, 8
        %s206 = scalar_lea.vmem [#allocation2], %s205
        // Predicated region
        $region33: #{tpu_custom_call.1} parent=31 // pred_check
          %p207 = pneg %p44
        $region34: #{tpu_custom_call.1} parent=31 // pred_check_branch
          %209 = sbr.rel (%p207) target = $region36
        $region35: #{tpu_custom_call.1} parent=31 // pred_region
          %210 = dma.done %s203, 128
        $region36: #{tpu_custom_call.1} parent=31 // pred_fallthru
          _
        %s211 = sand.u32 %s23, 1
        %s212 = scalar_lea.sflag [#allocation6], %s211
        %s213 = sand.u32 %s57, 1
        %s214 = smul.addr %s213, 8
        %s215 = scalar_lea.vmem [#allocation5], %s214
        // Predicated region
        $region37: #{tpu_custom_call.1} parent=31 // pred_check
          %p216 = pneg %p70
        $region38: #{tpu_custom_call.1} parent=31 // pred_check_branch
          %218 = sbr.rel (%p216) target = $region40
        $region39: #{tpu_custom_call.1} parent=31 // pred_region
          %219 = dma.done %s212, 128
        $region40: #{tpu_custom_call.1} parent=31 // pred_fallthru
          _
        %s220 = sand.u32 %s23, 1
        %s221 = scalar_lea.sflag [#allocation6], %s220
        %s222 = sand.u32 %s83, 1
        %s223 = smul.addr %s222, 8
        %s224 = scalar_lea.vmem [#allocation7], %s223
        // Predicated region
        $region41: #{tpu_custom_call.1} parent=31 // pred_check
          %p225 = pneg %p96
        $region42: #{tpu_custom_call.1} parent=31 // pred_check_branch
          %227 = sbr.rel (%p225) target = $region44
        $region43: #{tpu_custom_call.1} parent=31 // pred_region
          %228 = dma.done %s221, 128
        $region44: #{tpu_custom_call.1} parent=31 // pred_fallthru
          _
        %s229 = sand.u32 %s31, 1
        %s230 = scalar_lea.sflag [#allocation3], %s229
        %s231 = sand.u32 %s31, 1
        %s232 = smul.addr %s231, 8
        %s233 = scalar_lea.vmem [#allocation2], %s232
        %p234 = pneg %p44
        %p235 = pneg %p41
        %s236 = sand.u32 %s23, 1
        %s237 = scalar_lea.sflag [#allocation6], %s236
        %s238 = sand.u32 %s57, 1
        %s239 = smul.addr %s238, 8
        %s240 = scalar_lea.vmem [#allocation5], %s239
        %p241 = pneg %p70
        %p242 = pneg %p67
        %s243 = sand.u32 %s23, 1
        %s244 = scalar_lea.sflag [#allocation6], %s243
        %s245 = sand.u32 %s83, 1
        %s246 = smul.addr %s245, 8
        %s247 = scalar_lea.vmem [#allocation7], %s246
        %p248 = pneg %p96
        %p249 = pneg %p93
        %p250 = pneg %p122
        %p251 = pneg %p119
        %s252 = sand.u32 %s109, 1
        %s253 = scalar_lea.sflag [#allocation4], %s252
        %s254 = sand.u32 %s109, 1
        %s255 = smul.addr %s254, 8
        %s256 = scalar_lea.vmem [#allocation8], %s255
        %v257 = vld [vmem:[%s206] sm:$0xff]
        %v258 = vld [vmem:[%s215] sm:$0xff]
        %v259 = vld [vmem:[%s224] sm:$0xff]
        %v261 = vcombine.high %v257, %v257
        %v263 = vunpack.c.l.s4 1966171168
        %v264 = vunpack.c.0.s8 %v263
        %v265 = vlaneseq
        %v266 = vshrl.u32 %v265, 7
        %v267 = vsub.s32 %v264, %v266
        %v268 = vrot.slane %v257, %v267
        %v270 = vunpack.c.l.s4 1966171168
        %v271 = vunpack.c.0.s8 %v270
        %v272 = vlaneseq
        %v273 = vshrl.u32 %v272, 7
        %v274 = vsub.s32 %v271, %v273
        %v275 = vrot.slane %v261, %v274
        %v276 = vcombine.high %v268, %v268
        %v277 = vcombine.high %v275, %v275
        %v279 = vunpack.c.l.s4 1966171168
        %v280 = vunpack.c.0.s8 %v279
        %v281 = vlaneseq
        %v282 = vshrl.u32 %v281, 7
        %v283 = vsub.s32 %v280, %v282
        %v284 = vrot.slane %v268, %v283
        %v286 = vunpack.c.l.s4 1966171168
        %v287 = vunpack.c.0.s8 %v286
        %v288 = vlaneseq
        %v289 = vshrl.u32 %v288, 7
        %v290 = vsub.s32 %v287, %v289
        %v291 = vrot.slane %v275, %v290
        %v293 = vunpack.c.l.s4 1966171168
        %v294 = vunpack.c.0.s8 %v293
        %v295 = vlaneseq
        %v296 = vshrl.u32 %v295, 7
        %v297 = vsub.s32 %v294, %v296
        %v298 = vrot.slane %v276, %v297
        %v300 = vunpack.c.l.s4 1966171168
        %v301 = vunpack.c.0.s8 %v300
        %v302 = vlaneseq
        %v303 = vshrl.u32 %v302, 7
        %v304 = vsub.s32 %v301, %v303
        %v305 = vrot.slane %v277, %v304
        %v306 = vcombine.high %v284, %v284
        %v307 = vcombine.high %v291, %v291
        %v308 = vcombine.high %v298, %v298
        %v309 = vcombine.high %v305, %v305
        %v310 = vlaneseq
        %v311 = vshrl.u32 %v310, 7
        %v312 = vsub.s32 0, %v311
        %v313 = vrot.slane %v284, %v312
        %v314 = vlaneseq
        %v315 = vshrl.u32 %v314, 7
        %v316 = vsub.s32 0, %v315
        %v317 = vrot.slane %v298, %v316
        %v318 = vlaneseq
        %v319 = vshrl.u32 %v318, 7
        %v320 = vsub.s32 0, %v319
        %v321 = vrot.slane %v306, %v320
        %v322 = vlaneseq
        %v323 = vshrl.u32 %v322, 7
        %v324 = vsub.s32 0, %v323
        %v325 = vrot.slane %v308, %v324
        %v326 = vlaneseq
        %v327 = vshrl.u32 %v326, 7
        %v328 = vsub.s32 0, %v327
        %v329 = vrot.slane %v291, %v328
        %v330 = vlaneseq
        %v331 = vshrl.u32 %v330, 7
        %v332 = vsub.s32 0, %v331
        %v333 = vrot.slane %v305, %v332
        %v334 = vlaneseq
        %v335 = vshrl.u32 %v334, 7
        %v336 = vsub.s32 0, %v335
        %v337 = vrot.slane %v307, %v336
        %v338 = vlaneseq
        %v339 = vshrl.u32 %v338, 7
        %v340 = vsub.s32 0, %v339
        %v341 = vrot.slane %v309, %v340
        %v350 = vsub.f32 %v258, %v313
        %v351 = vsub.f32 %v258, %v317
        %v352 = vsub.f32 %v258, %v321
        %v353 = vsub.f32 %v258, %v325
        %v354 = vsub.f32 %v258, %v329
        %v355 = vsub.f32 %v258, %v333
        %v356 = vsub.f32 %v258, %v337
        %v357 = vsub.f32 %v258, %v341
        %v358 = vand.u32 2147483647, %v350
        %v359 = vand.u32 2147483647, %v351
        %v360 = vand.u32 2147483647, %v352
        %v361 = vand.u32 2147483647, %v353
        %v362 = vand.u32 2147483647, %v354
        %v363 = vand.u32 2147483647, %v355
        %v364 = vand.u32 2147483647, %v356
        %v365 = vand.u32 2147483647, %v357
        %vm366 = vcmask 261120
        %v367 = vsel %vm366, %v358, 0.0
        %368 = vadd.xlane.f32.xlu0 %v367
        %v369 = vpop.xlane.xlu0 %368
        %v370 = vsel %vm366, %v359, 0.0
        %371 = vadd.xlane.f32.xlu0 %v370
        %v372 = vpop.xlane.xlu0 %371
        %v373 = vsel %vm366, %v360, 0.0
        %374 = vadd.xlane.f32.xlu0 %v373
        %v375 = vpop.xlane.xlu0 %374
        %v376 = vsel %vm366, %v361, 0.0
        %377 = vadd.xlane.f32.xlu0 %v376
        %v378 = vpop.xlane.xlu0 %377
        %v379 = vsel %vm366, %v362, 0.0
        %380 = vadd.xlane.f32.xlu0 %v379
        %v381 = vpop.xlane.xlu0 %380
        %v382 = vsel %vm366, %v363, 0.0
        %383 = vadd.xlane.f32.xlu0 %v382
        %v384 = vpop.xlane.xlu0 %383
        %v385 = vsel %vm366, %v364, 0.0
        %386 = vadd.xlane.f32.xlu0 %v385
        %v387 = vpop.xlane.xlu0 %386
        %v388 = vsel %vm366, %v365, 0.0
        %389 = vadd.xlane.f32.xlu0 %v388
        %v390 = vpop.xlane.xlu0 %389
        %v391 = vmul.f32 %v369, -0.5
        %v392 = vmul.f32 %v372, -0.5
        %v393 = vmul.f32 %v375, -0.5
        %v394 = vmul.f32 %v378, -0.5
        %v395 = vmul.f32 %v381, -0.5
        %v396 = vmul.f32 %v384, -0.5
        %v397 = vmul.f32 %v387, -0.5
        %v398 = vmul.f32 %v390, -0.5
        %v407 = vlaneseq
        %v408 = vand.u32 %v407, 127
        %v409 = vlaneseq
        %v410 = vshrl.u32 %v409, 7
        %v411 = vsub.s32 %v408, %v410
        %v412 = vrot.slane %v391, %v411
        %v413 = vlaneseq
        %v414 = vshrl.u32 %v413, 7
        %v415 = vsub.s32 %v408, %v414
        %v416 = vrot.slane %v392, %v415
        %v417 = vlaneseq
        %v418 = vshrl.u32 %v417, 7
        %v419 = vsub.s32 %v408, %v418
        %v420 = vrot.slane %v393, %v419
        %v421 = vlaneseq
        %v422 = vshrl.u32 %v421, 7
        %v423 = vsub.s32 %v408, %v422
        %v424 = vrot.slane %v394, %v423
        %v425 = vlaneseq
        %v426 = vshrl.u32 %v425, 7
        %v427 = vsub.s32 %v408, %v426
        %v428 = vrot.slane %v395, %v427
        %v429 = vlaneseq
        %v430 = vshrl.u32 %v429, 7
        %v431 = vsub.s32 %v408, %v430
        %v432 = vrot.slane %v396, %v431
        %v433 = vlaneseq
        %v434 = vshrl.u32 %v433, 7
        %v435 = vsub.s32 %v408, %v434
        %v436 = vrot.slane %v397, %v435
        %v437 = vlaneseq
        %v438 = vshrl.u32 %v437, 7
        %v439 = vsub.s32 %v408, %v438
        %v440 = vrot.slane %v398, %v439
        %vm441 = vcmask 1041409
        %v442 = vsel %vm441, %v416, %v412
        %vm443 = vcmask 1042434
        %v444 = vsel %vm443, %v420, %v442
        %vm445 = vcmask 1043459
        %v446 = vsel %vm445, %v424, %v444
        %vm447 = vcmask 1044484
        %v448 = vsel %vm447, %v428, %v446
        %vm449 = vcmask 1045509
        %v450 = vsel %vm449, %v432, %v448
        %vm451 = vcmask 1046534
        %v452 = vsel %vm451, %v436, %v450
        %vm453 = vcmask 1047559
        %v454 = vsel %vm453, %v440, %v452
        %vm456 = vcmask 64512
        %v457 = vsel %vm456, %v454, -inf
        %458 = vmax.xlane.f32.xlu0 %v457
        %v459 = vpop.xlane.xlu0 %458
        %v461 = vlaneseq
        %v462 = vshrl.u32 %v461, 7
        %v463 = vsub.s32 0, %v462
        %v464 = vrot.slane %v459, %v463
        %v465 = vlaneseq
        %v466 = vshrl.u32 %v465, 7
        %v467 = vsub.s32 1, %v466
        %v468 = vrot.slane %v459, %v467
        %v469 = vlaneseq
        %v470 = vshrl.u32 %v469, 7
        %v471 = vsub.s32 2, %v470
        %v472 = vrot.slane %v459, %v471
        %v473 = vlaneseq
        %v474 = vshrl.u32 %v473, 7
        %v475 = vsub.s32 3, %v474
        %v476 = vrot.slane %v459, %v475
        %v477 = vlaneseq
        %v478 = vshrl.u32 %v477, 7
        %v479 = vsub.s32 4, %v478
        %v480 = vrot.slane %v459, %v479
        %v481 = vlaneseq
        %v482 = vshrl.u32 %v481, 7
        %v483 = vsub.s32 5, %v482
        %v484 = vrot.slane %v459, %v483
        %v485 = vlaneseq
        %v486 = vshrl.u32 %v485, 7
        %v487 = vsub.s32 6, %v486
        %v488 = vrot.slane %v459, %v487
        %v489 = vlaneseq
        %v490 = vshrl.u32 %v489, 7
        %v491 = vsub.s32 7, %v490
        %v492 = vrot.slane %v459, %v491
        %v501 = vsub.f32 %v391, %v464
        %v502 = vsub.f32 %v392, %v468
        %v503 = vsub.f32 %v393, %v472
        %v504 = vsub.f32 %v394, %v476
        %v505 = vsub.f32 %v395, %v480
        %v506 = vsub.f32 %v396, %v484
        %v507 = vsub.f32 %v397, %v488
        %v508 = vsub.f32 %v398, %v492
        %v509 = vmul.f32 %v501, 1.442695
        %v510 = vpow.pop %v509
        %v511 = vmul.f32 %v502, 1.442695
        %v512 = vpow.pop %v511
        %v513 = vmul.f32 %v503, 1.442695
        %v514 = vpow.pop %v513
        %v515 = vmul.f32 %v504, 1.442695
        %v516 = vpow.pop %v515
        %v517 = vmul.f32 %v505, 1.442695
        %v518 = vpow.pop %v517
        %v519 = vmul.f32 %v506, 1.442695
        %v520 = vpow.pop %v519
        %v521 = vmul.f32 %v507, 1.442695
        %v522 = vpow.pop %v521
        %v523 = vmul.f32 %v508, 1.442695
        %v524 = vpow.pop %v523
        %533 = vset.pattern.permute.xlu0 0
        %534 = vperm.xlu0 %533, %v510
        %v535 = vpop.permute.xlu0 %534
        %536 = vset.pattern.permute.xlu0 0
        %537 = vperm.xlu0 %536, %v512
        %v538 = vpop.permute.xlu0 %537
        %539 = vset.pattern.permute.xlu0 0
        %540 = vperm.xlu0 %539, %v514
        %v541 = vpop.permute.xlu0 %540
        %542 = vset.pattern.permute.xlu0 0
        %543 = vperm.xlu0 %542, %v516
        %v544 = vpop.permute.xlu0 %543
        %545 = vset.pattern.permute.xlu0 0
        %546 = vperm.xlu0 %545, %v518
        %v547 = vpop.permute.xlu0 %546
        %548 = vset.pattern.permute.xlu0 0
        %549 = vperm.xlu0 %548, %v520
        %v550 = vpop.permute.xlu0 %549
        %551 = vset.pattern.permute.xlu0 0
        %552 = vperm.xlu0 %551, %v522
        %v553 = vpop.permute.xlu0 %552
        %554 = vset.pattern.permute.xlu0 0
        %555 = vperm.xlu0 %554, %v524
        %v556 = vpop.permute.xlu0 %555
        %v557 = vlaneseq
        %v558 = vshrl.u32 %v557, 7
        %v559 = vsub.s32 %v408, %v558
        %v560 = vrot.slane %v535, %v559
        %v561 = vlaneseq
        %v562 = vshrl.u32 %v561, 7
        %v563 = vsub.s32 %v408, %v562
        %v564 = vrot.slane %v538, %v563
        %v565 = vlaneseq
        %v566 = vshrl.u32 %v565, 7
        %v567 = vsub.s32 %v408, %v566
        %v568 = vrot.slane %v541, %v567
        %v569 = vlaneseq
        %v570 = vshrl.u32 %v569, 7
        %v571 = vsub.s32 %v408, %v570
        %v572 = vrot.slane %v544, %v571
        %v573 = vlaneseq
        %v574 = vshrl.u32 %v573, 7
        %v575 = vsub.s32 %v408, %v574
        %v576 = vrot.slane %v547, %v575
        %v577 = vlaneseq
        %v578 = vshrl.u32 %v577, 7
        %v579 = vsub.s32 %v408, %v578
        %v580 = vrot.slane %v550, %v579
        %v581 = vlaneseq
        %v582 = vshrl.u32 %v581, 7
        %v583 = vsub.s32 %v408, %v582
        %v584 = vrot.slane %v553, %v583
        %v585 = vlaneseq
        %v586 = vshrl.u32 %v585, 7
        %v587 = vsub.s32 %v408, %v586
        %v588 = vrot.slane %v556, %v587
        %v589 = vsel %vm441, %v564, %v560
        %v590 = vsel %vm443, %v568, %v589
        %v591 = vsel %vm445, %v572, %v590
        %v592 = vsel %vm447, %v576, %v591
        %v593 = vsel %vm449, %v580, %v592
        %v594 = vsel %vm451, %v584, %v593
        %v595 = vsel %vm453, %v588, %v594
        %v597 = vsel %vm456, %v595, 0.0
        %598 = vadd.xlane.f32.xlu0 %v597
        %v599 = vpop.xlane.xlu0 %598
        %v600 = vrcp.pop %v599
        %v602 = vlaneseq
        %v603 = vshrl.u32 %v602, 7
        %v604 = vsub.s32 0, %v603
        %v605 = vrot.slane %v600, %v604
        %v606 = vlaneseq
        %v607 = vshrl.u32 %v606, 7
        %v608 = vsub.s32 1, %v607
        %v609 = vrot.slane %v600, %v608
        %v610 = vlaneseq
        %v611 = vshrl.u32 %v610, 7
        %v612 = vsub.s32 2, %v611
        %v613 = vrot.slane %v600, %v612
        %v614 = vlaneseq
        %v615 = vshrl.u32 %v614, 7
        %v616 = vsub.s32 3, %v615
        %v617 = vrot.slane %v600, %v616
        %v618 = vlaneseq
        %v619 = vshrl.u32 %v618, 7
        %v620 = vsub.s32 4, %v619
        %v621 = vrot.slane %v600, %v620
        %v622 = vlaneseq
        %v623 = vshrl.u32 %v622, 7
        %v624 = vsub.s32 5, %v623
        %v625 = vrot.slane %v600, %v624
        %v626 = vlaneseq
        %v627 = vshrl.u32 %v626, 7
        %v628 = vsub.s32 6, %v627
        %v629 = vrot.slane %v600, %v628
        %v630 = vlaneseq
        %v631 = vshrl.u32 %v630, 7
        %v632 = vsub.s32 7, %v631
        %v633 = vrot.slane %v600, %v632
        %v642 = vmul.f32 %v510, %v605
        %v643 = vmul.f32 %v512, %v609
        %v644 = vmul.f32 %v514, %v613
        %v645 = vmul.f32 %v516, %v617
        %v646 = vmul.f32 %v518, %v621
        %v647 = vmul.f32 %v520, %v625
        %v648 = vmul.f32 %v522, %v629
        %v649 = vmul.f32 %v524, %v633
        %658 = vset.pattern.permute.xlu0 0
        %659 = vperm.xlu0 %658, %v642
        %v660 = vpop.permute.xlu0 %659
        %661 = vset.pattern.permute.xlu0 0
        %662 = vperm.xlu0 %661, %v643
        %v663 = vpop.permute.xlu0 %662
        %664 = vset.pattern.permute.xlu0 0
        %665 = vperm.xlu0 %664, %v644
        %v666 = vpop.permute.xlu0 %665
        %667 = vset.pattern.permute.xlu0 0
        %668 = vperm.xlu0 %667, %v645
        %v669 = vpop.permute.xlu0 %668
        %670 = vset.pattern.permute.xlu0 0
        %671 = vperm.xlu0 %670, %v646
        %v672 = vpop.permute.xlu0 %671
        %673 = vset.pattern.permute.xlu0 0
        %674 = vperm.xlu0 %673, %v647
        %v675 = vpop.permute.xlu0 %674
        %676 = vset.pattern.permute.xlu0 0
        %677 = vperm.xlu0 %676, %v648
        %v678 = vpop.permute.xlu0 %677
        %679 = vset.pattern.permute.xlu0 0
        %680 = vperm.xlu0 %679, %v649
        %v681 = vpop.permute.xlu0 %680
        %v682 = vlaneseq
        %v683 = vshrl.u32 %v682, 7
        %v684 = vsub.s32 %v408, %v683
        %v685 = vrot.slane %v660, %v684
        %v686 = vlaneseq
        %v687 = vshrl.u32 %v686, 7
        %v688 = vsub.s32 %v408, %v687
        %v689 = vrot.slane %v663, %v688
        %v690 = vlaneseq
        %v691 = vshrl.u32 %v690, 7
        %v692 = vsub.s32 %v408, %v691
        %v693 = vrot.slane %v666, %v692
        %v694 = vlaneseq
        %v695 = vshrl.u32 %v694, 7
        %v696 = vsub.s32 %v408, %v695
        %v697 = vrot.slane %v669, %v696
        %v698 = vlaneseq
        %v699 = vshrl.u32 %v698, 7
        %v700 = vsub.s32 %v408, %v699
        %v701 = vrot.slane %v672, %v700
        %v702 = vlaneseq
        %v703 = vshrl.u32 %v702, 7
        %v704 = vsub.s32 %v408, %v703
        %v705 = vrot.slane %v675, %v704
        %v706 = vlaneseq
        %v707 = vshrl.u32 %v706, 7
        %v708 = vsub.s32 %v408, %v707
        %v709 = vrot.slane %v678, %v708
        %v710 = vlaneseq
        %v711 = vshrl.u32 %v710, 7
        %v712 = vsub.s32 %v408, %v711
        %v713 = vrot.slane %v681, %v712
        %v714 = vsel %vm441, %v689, %v685
        %v715 = vsel %vm443, %v693, %v714
        %v716 = vsel %vm445, %v697, %v715
        %v717 = vsel %vm447, %v701, %v716
        %v718 = vsel %vm449, %v705, %v717
        %v719 = vsel %vm451, %v709, %v718
        %v720 = vsel %vm453, %v713, %v719
        %v721 = vsel %vm456, %v720, 0
        %723 = vmatprep.subr.mxu0 0.0
        %724 = vmatpush1.msra.mxu0 %v259
        %725 = vmatprep.subr.mxu0 0.0
        %726 = vmatpush1.msra.mxu0 0.0
        %727 = vmatprep.subr.mxu0 0.0
        %728 = vmatpush1.msra.mxu0 0.0
        %729 = vmatprep.subr.mxu0 0.0
        %730 = vmatpush1.msra.mxu0 0.0
        %731 = vmatprep.subr.mxu0 0.0
        %732 = vmatpush1.msra.mxu0 0.0
        %733 = vmatprep.subr.mxu0 0.0
        %734 = vmatpush1.msra.mxu0 0.0
        %735 = vmatprep.subr.mxu0 0.0
        %736 = vmatpush1.msra.mxu0 0.0
        %737 = vmatprep.subr.mxu0 0.0
        %738 = vmatpush1.msra.mxu0 0.0
        %739 = vmatprep.subr.mxu0 0.0
        %740 = vmatpush1.msra.mxu0 0.0
        %741 = vmatprep.subr.mxu0 0.0
        %742 = vmatpush1.msra.mxu0 0.0
        %743 = vmatprep.subr.mxu0 0.0
        %744 = vmatpush1.msra.mxu0 0.0
        %745 = vmatprep.subr.mxu0 0.0
        %746 = vmatpush1.msra.mxu0 0.0
        %747 = vmatprep.subr.mxu0 0.0
        %748 = vmatpush1.msra.mxu0 0.0
        %749 = vmatprep.subr.mxu0 0.0
        %750 = vmatpush1.msra.mxu0 0.0
        %751 = vmatprep.subr.mxu0 0.0
        %752 = vmatpush1.msra.mxu0 0.0
        %753 = vmatprep.subr.mxu0 0.0
        %754 = vmatpush1.msra.mxu0 0.0
        %755 = vmatprep.subr.mxu0 0.0
        %756 = vmatpush1.msra.mxu0 0.0
        %757 = vmatprep.subr.mxu0 0.0
        %758 = vmatpush1.msra.mxu0 0.0
        %759 = vmatprep.subr.mxu0 0.0
        %760 = vmatpush1.msra.mxu0 0.0
        %761 = vmatprep.subr.mxu0 0.0
        %762 = vmatpush1.msra.mxu0 0.0
        %763 = vmatprep.subr.mxu0 0.0
        %764 = vmatpush1.msra.mxu0 0.0
        %765 = vmatprep.subr.mxu0 0.0
        %766 = vmatpush1.msra.mxu0 0.0
        %767 = vmatprep.subr.mxu0 0.0
        %768 = vmatpush1.msra.mxu0 0.0
        %769 = vmatprep.subr.mxu0 0.0
        %770 = vmatpush1.msra.mxu0 0.0
        %771 = vmatprep.subr.mxu0 0.0
        %772 = vmatpush1.msra.mxu0 0.0
        %773 = vmatprep.subr.mxu0 0.0
        %774 = vmatpush1.msra.mxu0 0.0
        %775 = vmatprep.subr.mxu0 0.0
        %776 = vmatpush1.msra.mxu0 0.0
        %777 = vmatprep.subr.mxu0 0.0
        %778 = vmatpush1.msra.mxu0 0.0
        %779 = vmatprep.subr.mxu0 0.0
        %780 = vmatpush1.msra.mxu0 0.0
        %781 = vmatprep.subr.mxu0 0.0
        %782 = vmatpush1.msra.mxu0 0.0
        %783 = vmatprep.subr.mxu0 0.0
        %784 = vmatpush1.msra.mxu0 0.0
        %785 = vmatprep.subr.mxu0 0.0
        %786 = vmatpush1.msra.mxu0 0.0
        %787 = vmatprep.mubr.f32.mxu0 0.0
        %788 = vmatmul.mubr.f32.gmra.mrb[0].mxu0 %v721
        %v789 = vpop.f32.mrb[0].mxu0
        %v790 = vadd.f32 0.0, %v789
        %v791 = vpop.f32.mrb[0].mxu0
        %792 = vdwg.mxu0
        %793 = vst.msk [vmem:[%s256] sm:$0xff] %vm366, %v790
        %s794 = sand.u32 %s109, 1
        %s795 = scalar_lea.sflag [#allocation4], %s794
        %s796 = sand.u32 %s109, 1
        %s797 = smul.addr %s796, 8
        %s798 = scalar_lea.vmem [#allocation8], %s797
        // Predicated region
        $region45: #{tpu_custom_call.1} parent=31 // pred_check
          %p799 = pneg %p119
        $region46: #{tpu_custom_call.1} parent=31 // pred_check_branch
          %801 = sbr.rel (%p799) target = $region48
        $region47: #{tpu_custom_call.1} parent=31 // pred_region
          %s803 = ssub.s32 128, 128
          %804 = vsyncadd %s795, %s803
          %s805 = smul.addr %s23, 128
          %s806 = scalar_lea.hbm %s3, %s805
          %s808 = sshll.u32 %s798, 4
          %s809 = int_to_ptr.vmem [resolvable:$true] %s808
          %811 = dma.vmem_to_hbm [thread:$0]  %s809, 128, %s806, %s795
        $region48: #{tpu_custom_call.1} parent=31 // pred_fallthru
          _
      $region32: #{tpu_custom_call.1} parent=5 // pred_fallthru
        _
      %p812 = scmp.le.s32.totalorder 2, %s18
      // Predicated region
      $region49: #{tpu_custom_call.1} parent=5 // pred_check
        %p813 = pneg %p812
      $region50: #{tpu_custom_call.1} parent=5 // pred_check_branch
        %815 = sbr.rel (%p813) target = $region52
      $region51: #{tpu_custom_call.1} parent=5 // pred_region
        %s816 = ssub.s32 %s18, 2
        // Predicated region
        $region53: #{tpu_custom_call.1} parent=51 // pred_check
          %p817 = pneg %p125
        $region54: #{tpu_custom_call.1} parent=51 // pred_check_branch
          %819 = sbr.rel (%p817) target = $region56
        $region55: #{tpu_custom_call.1} parent=51 // pred_region
          %s820 = sand.u32 %s110, 1
          %s821 = scalar_lea.sflag [#allocation4], %s820
          %s822 = sand.u32 %s110, 1
          %s823 = smul.addr %s822, 8
          %s824 = scalar_lea.vmem [#allocation8], %s823
          %825 = dma.done %s821, 128
        $region56: #{tpu_custom_call.1} parent=51 // pred_fallthru
          _
      $region52: #{tpu_custom_call.1} parent=5 // pred_fallthru
        _
    $region6: #{tpu_custom_call.1} parent=1 // loop_footer
      %s22 = sadd.s32 1, %s18
    $region7: #{tpu_custom_call.1} parent=1 // loop_footer_branch
      %17 = sbr.rel target = $region3
    $region8: #{tpu_custom_call.1} parent=1 // loop_exit
      _
    %826 = vsyncpa [#allocation3], 1
    %s827 = scalar_lea.sflag [#allocation3], 1
    %828 = vsyncpa %s827, 1
    %829 = vsyncpa [#allocation6], 1
    %s830 = scalar_lea.sflag [#allocation6], 1
    %831 = vsyncpa %s830, 1
    %832 = vsyncpa [#allocation4], 1
    %s833 = scalar_lea.sflag [#allocation4], 1
    %834 = vsyncpa %s833, 1

</llo_original>
